<compile_context>
chip_gen: v5e
topology: v5e:2x2
jax: 0.10.0
libtpu: 0.0.40
codegen_flags: <defaults>
</compile_context>

<pallas_src>
import functools

import jax
import jax.numpy as jnp
from jax.experimental import pallas as pl
from jax.experimental.pallas import tpu as pltpu


def _cdiv(a, b):
    return -(-a // b)


def _round_up(a, b):
    return _cdiv(a, b) * b


def _vmem_capacity_bytes():
    """Per-core VMEM capacity; conservative 64 MiB fallback if the query is unavailable."""
    try:
        info = pltpu.get_tpu_info()
        cap = int(getattr(info, "vmem_capacity_bytes", 0))
        if cap > 0:
            return cap
    except Exception:  # non-TPU backend / interpret harness
        pass
    return 64 * 1024 * 1024


def _choose_blocks(n, t, h, itemsize, block_n, block_t):
    """Pick (block_n, block_t, vmem_limit_bytes) for the streaming kernel."""
    pack = max(8, 32 // max(1, itemsize))      # sublane packing: f32 -> 8, bf16 -> 16, i8 -> 32
    vmem_cap = _vmem_capacity_bytes()
    if vmem_cap >= 96 * 1024 * 1024:           # v5e / v6e: 128 MiB physical VMEM
        x_budget, vmem_limit = 20 * 1024 * 1024, 64 * 1024 * 1024
    else:                                      # v7x: 64 MiB per TensorCore (or unknown)
        x_budget, vmem_limit = 12 * 1024 * 1024, 44 * 1024 * 1024

    # --- sequence block ---
    if block_t is not None:
        block_t = t if int(block_t) >= t else max(8, (int(block_t) // 8) * 8)
    elif pack * t * h * itemsize <= x_budget or t <= 8:
        block_t = t                            # common case: whole sequence in one tile
    else:
        # T-tiled online-softmax fallback for very long T / wide H.
        block_t = max(8, (x_budget // (pack * h * itemsize) // 8) * 8)
        block_t = min(block_t, t)

    # --- batch block ---
    if block_n is not None:
        block_n = max(pack, (int(block_n) // pack) * pack)
        block_n = min(block_n, _round_up(n, pack))
    else:
        bn = max(pack, (x_budget // max(1, block_t * h * itemsize) // pack) * pack)
        bn = min(bn, 1024, _round_up(n, pack))
        # Keep >= 4 batch grid steps when N allows it (>= 2 per TensorCore on v7x megacore,
        # and enough steps for the input pipeline to overlap DMA with compute).
        while bn > pack and _cdiv(n, bn) < 4:
            bn = max(pack, (bn // 2 // pack) * pack)
        block_n = bn

    return block_n, block_t, vmem_limit


def _sap_kernel(x_ref, w_ref, b_ref, o_ref, m_ref, l_ref, acc_ref, *, num_t, block_t):
    """Online-softmax self-attention pooling over one (block_n, block_t, H) tile.

    x_ref : (Bn, Bt, H)  VMEM input tile (input dtype)
    w_ref : (1, H)       VMEM lane-major Linear(H, 1) weight (f32)
    b_ref : (1, 1)       SMEM scalar bias (f32)
    o_ref : (Bn, H)      output tile
    m/l   : (Bn, 1) f32  running max / denominator scratch
    acc   : (Bn, H) f32  running unnormalized weighted-sum scratch
    """
    j = pl.program_id(1)

    @pl.when(j == 0)
    def _init():
        m_ref[...] = jnp.full_like(m_ref, -jnp.inf)
        l_ref[...] = jnp.zeros_like(l_ref)
        acc_ref[...] = jnp.zeros_like(acc_ref)

    x = x_ref[...]                                    # (Bn, Bt, H)
    w = w_ref[...]                                    # (1, H) f32

    # Lane-dense attention logits (Bn, Bt): VPU multiply + lane reduction over H.
    # (Bias added for fidelity; softmax is shift-invariant so it cannot change the output.)
    logits = jnp.sum(x * w[None, :, :], axis=-1) + b_ref[0, 0]        # (Bn, Bt) f32

    if num_t % block_t != 0:
        # Mask the out-of-range tail of the last sequence block (static condition).
        col = j * block_t + jax.lax.broadcasted_iota(jnp.int32, logits.shape, 1)
        valid = col < num_t
        logits = jnp.where(valid, logits, -jnp.inf)
        x = jnp.where(valid[:, :, None], x, jnp.zeros_like(x))

    # Online softmax update: all O(Bn*Bt) bookkeeping stays lane-dense.
    m_prev = m_ref[...]                                               # (Bn, 1)
    m_new = jnp.maximum(m_prev, jnp.max(logits, axis=-1, keepdims=True))
    alpha = jnp.exp(m_prev - m_new)                                   # (Bn, 1)
    p = jnp.exp(logits - m_new)                                       # (Bn, Bt) f32
    l_ref[...] = alpha * l_ref[...] + jnp.sum(p, axis=-1, keepdims=True)
    # f32 accumulation; p is broadcast back to (Bn, Bt, 1) only for this multiply.
    acc_ref[...] = alpha * acc_ref[...] + jnp.sum(x * p[:, :, None], axis=1)
    m_ref[...] = m_new

    @pl.when(j == pl.num_programs(1) - 1)
    def _finalize():
        # Deferred, exact normalization applied once to the (Bn, H) result.
        o_ref[...] = (acc_ref[...] / l_ref[...]).astype(o_ref.dtype)


def self_attention_pooling(batch_rep, w, b, *, block_n=None, block_t=None):
    """batch_rep: (N, T, H); w: (1, H) = nn.Linear(H, 1).weight; b: (1,) = nn.Linear(H, 1).bias.
    Returns (N, H) in batch_rep.dtype."""
    n, t, h = batch_rep.shape
    w = jnp.asarray(w, jnp.float32).reshape(1, h)
    b = jnp.asarray(b, jnp.float32).reshape(1, 1)

    itemsize = jnp.dtype(batch_rep.dtype).itemsize
    block_n, block_t, vmem_limit = _choose_blocks(n, t, h, itemsize, block_n, block_t)
    grid = (_cdiv(n, block_n), _cdiv(t, block_t))

    kernel = functools.partial(_sap_kernel, num_t=t, block_t=block_t)
    return pl.pallas_call(
        kernel,
        out_shape=jax.ShapeDtypeStruct((n, h), batch_rep.dtype),
        grid_spec=pltpu.PrefetchScalarGridSpec(
            num_scalar_prefetch=0,
            grid=grid,
            in_specs=[
                pl.BlockSpec((block_n, block_t, h), lambda i, j: (i, j, 0)),
                pl.BlockSpec((1, h), lambda i, j: (0, 0)),
                pl.BlockSpec(memory_space=pltpu.MemorySpace.SMEM),
            ],
            out_specs=pl.BlockSpec((block_n, h), lambda i, j: (i, 0)),
            scratch_shapes=[
                pltpu.VMEM((block_n, 1), jnp.float32),   # running max
                pltpu.VMEM((block_n, 1), jnp.float32),   # running denominator
                pltpu.VMEM((block_n, h), jnp.float32),   # running weighted sum (f32)
            ],
        ),
        compiler_params=pltpu.CompilerParams(
            dimension_semantics=("parallel", "arbitrary"),
            vmem_limit_bytes=vmem_limit,
        ),
    )(batch_rep, w, b)


def self_attention_pooling_ref(batch_rep, w, b):
    """Pure-JAX reference matching the PyTorch forward."""
    logits = jnp.einsum("nth,h->nt", batch_rep, jnp.reshape(w, (-1,))) + jnp.reshape(b, ())
    att = jax.nn.softmax(logits, axis=-1)[..., None]          # (N, T, 1)
    return jnp.sum(batch_rep * att, axis=1)                   # (N, H)


if __name__ == "__main__":
    key = jax.random.PRNGKey(0)
    ks = jax.random.split(key, 9)

    def make(kx, kw, kb, n, t, h):
        x = jax.random.normal(kx, (n, t, h), dtype=jnp.float32)
        bound = 1.0 / (h ** 0.5)
        wgt = jax.random.uniform(kw, (1, h), minval=-bound, maxval=bound, dtype=jnp.float32)
        bias = jax.random.uniform(kb, (1,), minval=-bound, maxval=bound, dtype=jnp.float32)
        return x, wgt, bias

    # 1) Small shapes from the module (N=2, T=8, H=32): one partial batch block.
    x1, w1, b1 = make(ks[0], ks[1], ks[2], 2, 8, 32)
    out1 = jax.block_until_ready(self_attention_pooling(x1, w1, b1))
    ref1 = self_attention_pooling_ref(x1, w1, b1)
    assert out1.shape == (2, 32)
    assert jnp.allclose(out1, ref1, atol=1e-4, rtol=1e-4), "mismatch vs reference (small)"

    # 2) Ragged batch (N=33, block_n=16): multi-step grid + masked partial last block,
    #    with no host-side padding copy of the input.
    x2, w2, b2 = make(ks[3], ks[4], ks[5], 33, 16, 128)
    out2 = jax.block_until_ready(self_attention_pooling(x2, w2, b2, block_n=16))
    ref2 = self_attention_pooling_ref(x2, w2, b2)
    assert out2.shape == (33, 128)
    assert jnp.allclose(out2, ref2, atol=1e-4, rtol=1e-4), "mismatch vs reference (ragged N)"

    # 3) T-tiled online-softmax path (T=24, block_t=16): two sequence steps including a
    #    masked partial sequence tail, plus a partial batch block (N=5).
    x3, w3, b3 = make(ks[6], ks[7], ks[8], 5, 24, 64)
    out3 = jax.block_until_ready(self_attention_pooling(x3, w3, b3, block_t=16))
    ref3 = self_attention_pooling_ref(x3, w3, b3)
    assert out3.shape == (5, 64)
    assert jnp.allclose(out3, ref3, atol=1e-4, rtol=1e-4), "mismatch vs reference (T-tiled)"

    print("KERNEL_OK")
</pallas_src>

<mosaic_0001>
module attributes {stable_mosaic.version = 11 : i64} {
  func.func @_sap_kernel(%arg0: i32, %arg1: i32, %arg2: memref<8x8x32xf32, #tpu.memory_space<vmem>>, %arg3: memref<1x32xf32, #tpu.memory_space<vmem>>, %arg4: memref<1x1xf32, #tpu.memory_space<smem>>, %arg5: memref<8x32xf32, #tpu.memory_space<vmem>>, %arg6: memref<8x1xf32, #tpu.memory_space<vmem>>, %arg7: memref<8x1xf32, #tpu.memory_space<vmem>>, %arg8: memref<8x32xf32, #tpu.memory_space<vmem>>) attributes {dimension_semantics = [#tpu.dimension_semantics<parallel>, #tpu.dimension_semantics<arbitrary>], iteration_bounds = array<i64: 1, 1>, scalar_prefetch = 0 : i64, scratch_operands = 3 : i64, tpu.core_type = #tpu.core_type<tc>, window_params = [{transform_indices = @transform_0, window_bounds = array<i64: 8, 8, 32>}, {pipeline_mode = #tpu.pipeline_mode<synchronous>, transform_indices = @transform_1, window_bounds = array<i64: 1, 32>}, {transform_indices = @transform_2, window_bounds = array<i64: 1, 1>}, {transform_indices = @transform_3, window_bounds = array<i64: 8, 32>}]} {
    %c0_i32 = arith.constant 0 : i32
    %0 = arith.cmpi eq, %arg1, %c0_i32 : i32
    %1 = arith.extui %0 : i1 to i32
    %c0_i32_0 = arith.constant 0 : i32
    %2 = arith.cmpi ne, %1, %c0_i32_0 : i32
    scf.if %2 {
      %cst_24 = arith.constant 0xFF800000 : f32
      %40 = vector.broadcast %cst_24 : f32 to vector<8x1xf32>
      %c0_25 = arith.constant 0 : index
      %c0_26 = arith.constant 0 : index
      %41 = vector.load %arg6[%c0_25, %c0_26] : memref<8x1xf32, #tpu.memory_space<vmem>>, vector<8x1xf32>
      tpu.vector_store %arg6[%c0_25, %c0_26], %40 {strides = array<i32>} : memref<8x1xf32, #tpu.memory_space<vmem>>, vector<8x1xf32>,
      %cst_27 = arith.constant 0.000000e+00 : f32
      %42 = vector.broadcast %cst_27 : f32 to vector<8x1xf32>
      %c0_28 = arith.constant 0 : index
      %c0_29 = arith.constant 0 : index
      %43 = vector.load %arg7[%c0_28, %c0_29] : memref<8x1xf32, #tpu.memory_space<vmem>>, vector<8x1xf32>
      tpu.vector_store %arg7[%c0_28, %c0_29], %42 {strides = array<i32>} : memref<8x1xf32, #tpu.memory_space<vmem>>, vector<8x1xf32>,
      %cst_30 = arith.constant 0.000000e+00 : f32
      %44 = vector.broadcast %cst_30 : f32 to vector<8x32xf32>
      %c0_31 = arith.constant 0 : index
      %c0_32 = arith.constant 0 : index
      %45 = vector.load %arg8[%c0_31, %c0_32] : memref<8x32xf32, #tpu.memory_space<vmem>>, vector<8x32xf32>
      tpu.vector_store %arg8[%c0_31, %c0_32], %44 {strides = array<i32>} : memref<8x32xf32, #tpu.memory_space<vmem>>, vector<8x32xf32>,
    } else {
    }
    %c0 = arith.constant 0 : index
    %c0_1 = arith.constant 0 : index
    %c0_2 = arith.constant 0 : index
    %3 = vector.load %arg2[%c0, %c0_1, %c0_2] : memref<8x8x32xf32, #tpu.memory_space<vmem>>, vector<8x8x32xf32>
    %c0_3 = arith.constant 0 : index
    %c0_4 = arith.constant 0 : index
    %4 = vector.load %arg3[%c0_3, %c0_4] : memref<1x32xf32, #tpu.memory_space<vmem>>, vector<1x32xf32>
    %5 = vector.shape_cast %4 : vector<1x32xf32> to vector<1x1x32xf32>
    %6 = vector.broadcast %5 : vector<1x1x32xf32> to vector<8x8x32xf32>
    %7 = arith.mulf %3, %6 : vector<8x8x32xf32>
    %cst = arith.constant dense<0.000000e+00> : vector<8x8xf32>
    %8 = vector.multi_reduction <add>, %7, %cst [2] : vector<8x8x32xf32> to vector<8x8xf32>
    %c0_5 = arith.constant 0 : index
    %c0_6 = arith.constant 0 : index
    %9 = memref.load %arg4[%c0_5, %c0_6] : memref<1x1xf32, #tpu.memory_space<smem>>
    %10 = vector.broadcast %9 : f32 to vector<8x8xf32>
    %11 = arith.addf %8, %10 : vector<8x8xf32>
    %c0_7 = arith.constant 0 : index
    %c0_8 = arith.constant 0 : index
    %12 = vector.load %arg6[%c0_7, %c0_8] : memref<8x1xf32, #tpu.memory_space<vmem>>, vector<8x1xf32>
    %cst_9 = arith.constant dense<0xFF800000> : vector<8xf32>
    %13 = vector.multi_reduction <maximumf>, %11, %cst_9 [1] : vector<8x8xf32> to vector<8xf32>
    %14 = vector.shape_cast %13 : vector<8xf32> to vector<8x1xf32>
    %15 = arith.maximumf %12, %14 : vector<8x1xf32>
    %16 = arith.subf %12, %15 : vector<8x1xf32>
    %17 = math.exp %16 : vector<8x1xf32>
    %18 = vector.broadcast %15 : vector<8x1xf32> to vector<8x8xf32>
    %19 = arith.subf %11, %18 : vector<8x8xf32>
    %20 = math.exp %19 : vector<8x8xf32>
    %c0_10 = arith.constant 0 : index
    %c0_11 = arith.constant 0 : index
    %21 = vector.load %arg7[%c0_10, %c0_11] : memref<8x1xf32, #tpu.memory_space<vmem>>, vector<8x1xf32>
    %22 = arith.mulf %17, %21 : vector<8x1xf32>
    %cst_12 = arith.constant dense<0.000000e+00> : vector<8xf32>
    %23 = vector.multi_reduction <add>, %20, %cst_12 [1] : vector<8x8xf32> to vector<8xf32>
    %24 = vector.shape_cast %23 : vector<8xf32> to vector<8x1xf32>
    %25 = arith.addf %22, %24 : vector<8x1xf32>
    %c0_13 = arith.constant 0 : index
    %c0_14 = arith.constant 0 : index
    %26 = vector.load %arg7[%c0_13, %c0_14] : memref<8x1xf32, #tpu.memory_space<vmem>>, vector<8x1xf32>
    tpu.vector_store %arg7[%c0_13, %c0_14], %25 {strides = array<i32>} : memref<8x1xf32, #tpu.memory_space<vmem>>, vector<8x1xf32>,
    %c0_15 = arith.constant 0 : index
    %c0_16 = arith.constant 0 : index
    %27 = vector.load %arg8[%c0_15, %c0_16] : memref<8x32xf32, #tpu.memory_space<vmem>>, vector<8x32xf32>
    %28 = vector.broadcast %17 : vector<8x1xf32> to vector<8x32xf32>
    %29 = arith.mulf %28, %27 : vector<8x32xf32>
    %30 = vector.shape_cast %20 : vector<8x8xf32> to vector<8x8x1xf32>
    %31 = vector.broadcast %30 : vector<8x8x1xf32> to vector<8x8x32xf32>
    %32 = arith.mulf %3, %31 : vector<8x8x32xf32>
    %cst_17 = arith.constant dense<0.000000e+00> : vector<8x32xf32>
    %33 = vector.multi_reduction <add>, %32, %cst_17 [1] : vector<8x8x32xf32> to vector<8x32xf32>
    %34 = arith.addf %29, %33 : vector<8x32xf32>
    %c0_18 = arith.constant 0 : index
    %c0_19 = arith.constant 0 : index
    %35 = vector.load %arg8[%c0_18, %c0_19] : memref<8x32xf32, #tpu.memory_space<vmem>>, vector<8x32xf32>
    tpu.vector_store %arg8[%c0_18, %c0_19], %34 {strides = array<i32>} : memref<8x32xf32, #tpu.memory_space<vmem>>, vector<8x32xf32>,
    %c0_20 = arith.constant 0 : index
    %c0_21 = arith.constant 0 : index
    %36 = vector.load %arg6[%c0_20, %c0_21] : memref<8x1xf32, #tpu.memory_space<vmem>>, vector<8x1xf32>
    tpu.vector_store %arg6[%c0_20, %c0_21], %15 {strides = array<i32>} : memref<8x1xf32, #tpu.memory_space<vmem>>, vector<8x1xf32>,
    %c0_i32_22 = arith.constant 0 : i32
    %37 = arith.cmpi eq, %arg1, %c0_i32_22 : i32
    %38 = arith.extui %37 : i1 to i32
    %c0_i32_23 = arith.constant 0 : i32
    %39 = arith.cmpi ne, %38, %c0_i32_23 : i32
    scf.if %39 {
      %c0_24 = arith.constant 0 : index
      %c0_25 = arith.constant 0 : index
      %40 = vector.load %arg8[%c0_24, %c0_25] : memref<8x32xf32, #tpu.memory_space<vmem>>, vector<8x32xf32>
      %c0_26 = arith.constant 0 : index
      %c0_27 = arith.constant 0 : index
      %41 = vector.load %arg7[%c0_26, %c0_27] : memref<8x1xf32, #tpu.memory_space<vmem>>, vector<8x1xf32>
      %42 = vector.broadcast %41 : vector<8x1xf32> to vector<8x32xf32>
      %43 = arith.divf %40, %42 : vector<8x32xf32>
      %c0_28 = arith.constant 0 : index
      %c0_29 = arith.constant 0 : index
      %44 = vector.load %arg5[%c0_28, %c0_29] : memref<8x32xf32, #tpu.memory_space<vmem>>, vector<8x32xf32>
      tpu.vector_store %arg5[%c0_28, %c0_29], %43 {strides = array<i32>} : memref<8x32xf32, #tpu.memory_space<vmem>>, vector<8x32xf32>,
    } else {
    }
    return
  }
  func.func @transform_0(%arg0: i32, %arg1: i32) -> (i32, i32, i32) {
    %c0_i32 = arith.constant 0 : i32
    %c0_i32_0 = arith.constant 0 : i32
    return %arg0, %arg1, %c0_i32 : i32, i32, i32
  }
  func.func @transform_1(%arg0: i32, %arg1: i32) -> (i32, i32) {
    %c0_i32 = arith.constant 0 : i32
    %c0_i32_0 = arith.constant 0 : i32
    %c0_i32_1 = arith.constant 0 : i32
    return %c0_i32, %c0_i32_0 : i32, i32
  }
  func.func @transform_2(%arg0: i32, %arg1: i32) -> (i32, i32) {
    %c0_i32 = arith.constant 0 : i32
    %c0_i32_0 = arith.constant 0 : i32
    %c0_i32_1 = arith.constant 0 : i32
    return %c0_i32, %c0_i32_0 : i32, i32
  }
  func.func @transform_3(%arg0: i32, %arg1: i32) -> (i32, i32) {
    %c0_i32 = arith.constant 0 : i32
    %c0_i32_0 = arith.constant 0 : i32
    return %arg0, %c0_i32 : i32, i32
  }
}

</mosaic_0001>

<llo_original>
// kernel: tpu_custom_call.1
$region0: #{tpu_custom_call.1}
  #allocation0 [shape = 'u32[]', space=smem, size = 0x4, offset = 0x4, fixed_abs, tag = 'smem constant byte address 0x4 - core index']
  #allocation1 [shape = 'u32[72,128]{1,0:T(1,128)}', space=vmem, size = 0x9000, scoped, tag = 'internal scratch']
  #allocation2 [shape = 'f32[8,1]{1,0:T(8,128)}', space=vmem, size = 0x1000, scoped, tag = 'scratch operand']
  #allocation3 [shape = 'f32[8,1]{1,0:T(8,128)}', space=vmem, size = 0x1000, scoped, tag = 'scratch operand']
  #allocation4 [shape = 'f32[8,32]{1,0:T(8,128)}', space=vmem, size = 0x1000, scoped, tag = 'scratch operand']
  #allocation5 [shape = 'f32[1,1]{1,0:T(1,128)S(6)}', space=smem, size = 0x200, scoped, tag = 'scoped memory for tpu_custom_call.1']
  %s0 = inlined_call_operand.hbm [shape: f32[2,8,32], index: 0, kind: input, shape index: {}]
  %s1 = inlined_call_operand.vmem [shape: f32[1,32], index: 1, kind: input, shape index: {}]
  %s2 = inlined_call_operand.<no memory space> [shape: f32[1,1], index: 2, kind: input, shape index: {}]
  %s3 = inlined_call_operand.hbm [shape: f32[2,32], index: 3, kind: output, shape index: {}]
  %s4 = sld [smem:[#allocation0]]
  $region34: #{tpu_custom_call.1} parent=0
    _
  %s6 = ssub.s32 1, %s4
  %s7 = scalar_select 0, %s6, %s4
  %8 = sst [smem:[#allocation5]] %s2
  $region1: #{tpu_custom_call.1} parent=0
    #allocation6 [shape = 'u8[32768]{0}', space=vmem, size = 0x8000, scoped, tag = 'input window, operand 0, single buffered']
    #allocation7 [shape = 's32[1]{0}', space=sflag, size = 0x4, scoped, tag = 'scoped memory for tpu_custom_call.1']
    #allocation8 [shape = 's32[1]{0}', space=sflag, size = 0x4, scoped, tag = 'scoped memory for tpu_custom_call.1']
    #allocation9 [shape = 'u8[4096]{0}', space=vmem, size = 0x1000, scoped, tag = 'output window, operand 0, single buffered']
    %9 = vsyncpa [#allocation7], 0
    %10 = vsyncpa [#allocation8], 0
    // Predicated region
    $region2: #{tpu_custom_call.1} parent=1 // pred_check
      _
    $region3: #{tpu_custom_call.1} parent=1 // pred_check_branch
      %12 = sbr.rel (0) target = $region5
    $region4: #{tpu_custom_call.1} parent=1 // pred_region
      %14 = vsyncadd [#allocation7], 768
      %s15 = sshll.u32 %s0, 4
      %s16 = int_to_ptr.hbm [resolvable:$true] %s15
      %s17 = sshll.u32 [#allocation6], 4
      %s18 = int_to_ptr.vmem [resolvable:$true] %s17
      %23 = dma.hbm_to_vmem [thread:$0]  %s16, 256, %s18, [#allocation7], 128, 128, 8
    $region5: #{tpu_custom_call.1} parent=1 // pred_fallthru
      _
    // Predicated region
    $region6: #{tpu_custom_call.1} parent=1 // pred_check
      _
    $region7: #{tpu_custom_call.1} parent=1 // pred_check_branch
      %25 = sbr.rel (0) target = $region9
    $region8: #{tpu_custom_call.1} parent=1 // pred_region
      _
    $region9: #{tpu_custom_call.1} parent=1 // pred_fallthru
      _
    // Predicated region
    $region10: #{tpu_custom_call.1} parent=1 // pred_check
      _
    $region11: #{tpu_custom_call.1} parent=1 // pred_check_branch
      %27 = sbr.rel (0) target = $region13
    $region12: #{tpu_custom_call.1} parent=1 // pred_region
      _
    $region13: #{tpu_custom_call.1} parent=1 // pred_fallthru
      _
    // Predicated region
    $region14: #{tpu_custom_call.1} parent=1 // pred_check
      _
    $region15: #{tpu_custom_call.1} parent=1 // pred_check_branch
      %29 = sbr.rel (0) target = $region17
    $region16: #{tpu_custom_call.1} parent=1 // pred_region
      %31 = dma.done [#allocation7], 1024
    $region17: #{tpu_custom_call.1} parent=1 // pred_fallthru
      _
    %p32 = scmp.eq.s32.totalorder 0, 0
    // Predicated region
    $region18: #{tpu_custom_call.1} parent=1 // pred_check
      %p33 = pneg %p32
    $region19: #{tpu_custom_call.1} parent=1 // pred_check_branch
      %35 = sbr.rel (%p33) target = $region21
    $region20: #{tpu_custom_call.1} parent=1 // pred_region
      %vm36 = vcmask 7168
      %37 = vst.msk [vmem:[#allocation2] sm:$0xff] %vm36, -inf
      %38 = vst.msk [vmem:[#allocation3] sm:$0xff] %vm36, 0.0
      %vm39 = vcmask 261120
      %40 = vst.msk [vmem:[#allocation4] sm:$0xff] %vm39, 0.0
    $region21: #{tpu_custom_call.1} parent=1 // pred_fallthru
      _
    %v41 = vld [vmem:[#allocation6] sm:$0xff]
    %v42 = vld [vmem:[#allocation6 + $0x8] sm:$0xff]
    %v43 = vld [vmem:[#allocation6 + $0x10] sm:$0xff]
    %v44 = vld [vmem:[#allocation6 + $0x18] sm:$0xff]
    %v45 = vld [vmem:[#allocation6 + $0x20] sm:$0xff]
    %v46 = vld [vmem:[#allocation6 + $0x28] sm:$0xff]
    %v47 = vld [vmem:[#allocation6 + $0x30] sm:$0xff]
    %v48 = vld [vmem:[#allocation6 + $0x38] sm:$0xff]
    %v49 = vld [vmem:[%s1] sm:$0x1]
    %v51 = vperm.slane %v49, 0
    %v53 = vmul.f32 %v41, %v51
    %v54 = vmul.f32 %v42, %v51
    %v55 = vmul.f32 %v43, %v51
    %v56 = vmul.f32 %v44, %v51
    %v57 = vmul.f32 %v45, %v51
    %v58 = vmul.f32 %v46, %v51
    %v59 = vmul.f32 %v47, %v51
    %v60 = vmul.f32 %v48, %v51
    %vm61 = vcmask 261120
    %v62 = vsel %vm61, %v53, 0.0
    %63 = vadd.xlane.f32.xlu0 %v62
    %v64 = vpop.xlane.xlu0 %63
    %v65 = vsel %vm61, %v54, 0.0
    %66 = vadd.xlane.f32.xlu0 %v65
    %v67 = vpop.xlane.xlu0 %66
    %v68 = vsel %vm61, %v55, 0.0
    %69 = vadd.xlane.f32.xlu0 %v68
    %v70 = vpop.xlane.xlu0 %69
    %v71 = vsel %vm61, %v56, 0.0
    %72 = vadd.xlane.f32.xlu0 %v71
    %v73 = vpop.xlane.xlu0 %72
    %v74 = vsel %vm61, %v57, 0.0
    %75 = vadd.xlane.f32.xlu0 %v74
    %v76 = vpop.xlane.xlu0 %75
    %v77 = vsel %vm61, %v58, 0.0
    %78 = vadd.xlane.f32.xlu0 %v77
    %v79 = vpop.xlane.xlu0 %78
    %v80 = vsel %vm61, %v59, 0.0
    %81 = vadd.xlane.f32.xlu0 %v80
    %v82 = vpop.xlane.xlu0 %81
    %v83 = vsel %vm61, %v60, 0.0
    %84 = vadd.xlane.f32.xlu0 %v83
    %v85 = vpop.xlane.xlu0 %84
    %s86 = sld [smem:[#allocation5]]
    %v87 = vstv %s86
    %v88 = vadd.f32 %v64, %v87
    %v89 = vadd.f32 %v67, %v87
    %v90 = vadd.f32 %v70, %v87
    %v91 = vadd.f32 %v73, %v87
    %v92 = vadd.f32 %v76, %v87
    %v93 = vadd.f32 %v79, %v87
    %v94 = vadd.f32 %v82, %v87
    %v95 = vadd.f32 %v85, %v87
    %v96 = vld [vmem:[#allocation2] sm:$0xff]
    %v105 = vlaneseq
    %v106 = vand.u32 %v105, 127
    %v107 = vperm.slane %v88, %v106
    %v108 = vperm.slane %v89, %v106
    %v109 = vperm.slane %v90, %v106
    %v110 = vperm.slane %v91, %v106
    %v111 = vperm.slane %v92, %v106
    %v112 = vperm.slane %v93, %v106
    %v113 = vperm.slane %v94, %v106
    %v114 = vperm.slane %v95, %v106
    %vm115 = vcmask 1041409
    %v116 = vsel %vm115, %v108, %v107
    %vm117 = vcmask 1042434
    %v118 = vsel %vm117, %v109, %v116
    %vm119 = vcmask 1043459
    %v120 = vsel %vm119, %v110, %v118
    %vm121 = vcmask 1044484
    %v122 = vsel %vm121, %v111, %v120
    %vm123 = vcmask 1045509
    %v124 = vsel %vm123, %v112, %v122
    %vm125 = vcmask 1046534
    %v126 = vsel %vm125, %v113, %v124
    %vm127 = vcmask 1047559
    %v128 = vsel %vm127, %v114, %v126
    %vm130 = vcmask 64512
    %v131 = vsel %vm130, %v128, -inf
    %132 = vmax.xlane.f32.xlu0 %v131
    %v133 = vpop.xlane.xlu0 %132
    %v134 = vmax.f32 %v96, %v133
    %v135 = vsub.f32 %v96, %v134
    %v136 = vmul.f32 %v135, 1.442695
    %v137 = vpow.pop %v136
    %139 = vset.pattern.permute.xlu0 0
    %140 = vperm.xlu0 %139, %v134
    %v141 = vpop.permute.xlu0 %140
    %v142 = vperm.slane %v141, 0
    %v143 = vperm.slane %v141, 1
    %v144 = vperm.slane %v141, 2
    %v145 = vperm.slane %v141, 3
    %v146 = vperm.slane %v141, 4
    %v147 = vperm.slane %v141, 5
    %v148 = vperm.slane %v141, 6
    %v149 = vperm.slane %v141, 7
    %v158 = vsub.f32 %v88, %v142
    %v159 = vsub.f32 %v89, %v143
    %v160 = vsub.f32 %v90, %v144
    %v161 = vsub.f32 %v91, %v145
    %v162 = vsub.f32 %v92, %v146
    %v163 = vsub.f32 %v93, %v147
    %v164 = vsub.f32 %v94, %v148
    %v165 = vsub.f32 %v95, %v149
    %v166 = vmul.f32 %v158, 1.442695
    %v167 = vpow.pop %v166
    %v168 = vmul.f32 %v159, 1.442695
    %v169 = vpow.pop %v168
    %v170 = vmul.f32 %v160, 1.442695
    %v171 = vpow.pop %v170
    %v172 = vmul.f32 %v161, 1.442695
    %v173 = vpow.pop %v172
    %v174 = vmul.f32 %v162, 1.442695
    %v175 = vpow.pop %v174
    %v176 = vmul.f32 %v163, 1.442695
    %v177 = vpow.pop %v176
    %v178 = vmul.f32 %v164, 1.442695
    %v179 = vpow.pop %v178
    %v180 = vmul.f32 %v165, 1.442695
    %v181 = vpow.pop %v180
    %v182 = vld [vmem:[#allocation3] sm:$0xff]
    %v183 = vmul.f32 %v137, %v182
    %192 = vset.pattern.permute.xlu0 0
    %193 = vperm.xlu0 %192, %v167
    %v194 = vpop.permute.xlu0 %193
    %195 = vset.pattern.permute.xlu0 0
    %196 = vperm.xlu0 %195, %v169
    %v197 = vpop.permute.xlu0 %196
    %198 = vset.pattern.permute.xlu0 0
    %199 = vperm.xlu0 %198, %v171
    %v200 = vpop.permute.xlu0 %199
    %201 = vset.pattern.permute.xlu0 0
    %202 = vperm.xlu0 %201, %v173
    %v203 = vpop.permute.xlu0 %202
    %204 = vset.pattern.permute.xlu0 0
    %205 = vperm.xlu0 %204, %v175
    %v206 = vpop.permute.xlu0 %205
    %207 = vset.pattern.permute.xlu0 0
    %208 = vperm.xlu0 %207, %v177
    %v209 = vpop.permute.xlu0 %208
    %210 = vset.pattern.permute.xlu0 0
    %211 = vperm.xlu0 %210, %v179
    %v212 = vpop.permute.xlu0 %211
    %213 = vset.pattern.permute.xlu0 0
    %214 = vperm.xlu0 %213, %v181
    %v215 = vpop.permute.xlu0 %214
    %v216 = vperm.slane %v194, %v106
    %v217 = vperm.slane %v197, %v106
    %v218 = vperm.slane %v200, %v106
    %v219 = vperm.slane %v203, %v106
    %v220 = vperm.slane %v206, %v106
    %v221 = vperm.slane %v209, %v106
    %v222 = vperm.slane %v212, %v106
    %v223 = vperm.slane %v215, %v106
    %v224 = vsel %vm115, %v217, %v216
    %v225 = vsel %vm117, %v218, %v224
    %v226 = vsel %vm119, %v219, %v225
    %v227 = vsel %vm121, %v220, %v226
    %v228 = vsel %vm123, %v221, %v227
    %v229 = vsel %vm125, %v222, %v228
    %v230 = vsel %vm127, %v223, %v229
    %v232 = vsel %vm130, %v230, 0.0
    %233 = vadd.xlane.f32.xlu0 %v232
    %v234 = vpop.xlane.xlu0 %233
    %v235 = vadd.f32 %v183, %v234
    %vm236 = vcmask 7168
    %237 = vst.msk [vmem:[#allocation3] sm:$0xff] %vm236, %v235
    %v238 = vld [vmem:[#allocation4] sm:$0xff]
    %240 = vset.pattern.permute.xlu0 0
    %241 = vperm.xlu0 %240, %v137
    %v242 = vpop.permute.xlu0 %241
    %v244 = vmul.f32 %v242, %v238
    %v253 = vmul.f32 %v41, %v194
    %v254 = vmul.f32 %v42, %v197
    %v255 = vmul.f32 %v43, %v200
    %v256 = vmul.f32 %v44, %v203
    %v257 = vmul.f32 %v45, %v206
    %v258 = vmul.f32 %v46, %v209
    %v259 = vmul.f32 %v47, %v212
    %v260 = vmul.f32 %v48, %v215
    %v261 = vsel %vm61, %v253, 0.0
    %v262 = vrot.slane %v261, 4
    %v263 = vadd.f32 %v261, %v262
    %v264 = vrot.slane %v263, 2
    %v265 = vadd.f32 %v263, %v264
    %v266 = vrot.slane %v265, 1
    %v267 = vadd.f32 %v265, %v266
    %v268 = vsel %vm61, %v254, 0.0
    %v269 = vrot.slane %v268, 4
    %v270 = vadd.f32 %v268, %v269
    %v271 = vrot.slane %v270, 2
    %v272 = vadd.f32 %v270, %v271
    %v273 = vrot.slane %v272, 1
    %v274 = vadd.f32 %v272, %v273
    %v275 = vsel %vm61, %v255, 0.0
    %v276 = vrot.slane %v275, 4
    %v277 = vadd.f32 %v275, %v276
    %v278 = vrot.slane %v277, 2
    %v279 = vadd.f32 %v277, %v278
    %v280 = vrot.slane %v279, 1
    %v281 = vadd.f32 %v279, %v280
    %v282 = vsel %vm61, %v256, 0.0
    %v283 = vrot.slane %v282, 4
    %v284 = vadd.f32 %v282, %v283
    %v285 = vrot.slane %v284, 2
    %v286 = vadd.f32 %v284, %v285
    %v287 = vrot.slane %v286, 1
    %v288 = vadd.f32 %v286, %v287
    %v289 = vsel %vm61, %v257, 0.0
    %v290 = vrot.slane %v289, 4
    %v291 = vadd.f32 %v289, %v290
    %v292 = vrot.slane %v291, 2
    %v293 = vadd.f32 %v291, %v292
    %v294 = vrot.slane %v293, 1
    %v295 = vadd.f32 %v293, %v294
    %v296 = vsel %vm61, %v258, 0.0
    %v297 = vrot.slane %v296, 4
    %v298 = vadd.f32 %v296, %v297
    %v299 = vrot.slane %v298, 2
    %v300 = vadd.f32 %v298, %v299
    %v301 = vrot.slane %v300, 1
    %v302 = vadd.f32 %v300, %v301
    %v303 = vsel %vm61, %v259, 0.0
    %v304 = vrot.slane %v303, 4
    %v305 = vadd.f32 %v303, %v304
    %v306 = vrot.slane %v305, 2
    %v307 = vadd.f32 %v305, %v306
    %v308 = vrot.slane %v307, 1
    %v309 = vadd.f32 %v307, %v308
    %v310 = vsel %vm61, %v260, 0.0
    %v311 = vrot.slane %v310, 4
    %v312 = vadd.f32 %v310, %v311
    %v313 = vrot.slane %v312, 2
    %v314 = vadd.f32 %v312, %v313
    %v315 = vrot.slane %v314, 1
    %v316 = vadd.f32 %v314, %v315
    %v325 = vsel %vm115, %v274, %v267
    %v326 = vsel %vm117, %v281, %v325
    %v327 = vsel %vm119, %v288, %v326
    %v328 = vsel %vm121, %v295, %v327
    %v329 = vsel %vm123, %v302, %v328
    %v330 = vsel %vm125, %v309, %v329
    %v331 = vsel %vm127, %v316, %v330
    %v333 = vadd.f32 %v244, %v331
    %334 = vst.msk [vmem:[#allocation4] sm:$0xff] %vm61, %v333
    %335 = vst.msk [vmem:[#allocation2] sm:$0xff] %vm236, %v134
    // Predicated region
    $region22: #{tpu_custom_call.1} parent=1 // pred_check
      %p336 = pneg %p32
    $region23: #{tpu_custom_call.1} parent=1 // pred_check_branch
      %338 = sbr.rel (%p336) target = $region25
    $region24: #{tpu_custom_call.1} parent=1 // pred_region
      %v339 = vld [vmem:[#allocation4] sm:$0xff]
      %v340 = vld [vmem:[#allocation3] sm:$0xff]
      %342 = vset.pattern.permute.xlu0 0
      %343 = vperm.xlu0 %342, %v340
      %v344 = vpop.permute.xlu0 %343
      %v346 = vrcp.pop %v344
      %v347 = vmul.f32 %v344, %v346
      %v348 = vsub.f32 1.0, %v347
      %v349 = vmul.f32 %v346, %v348
      %v350 = vadd.f32 %v346, %v349
      %vm351 = vweird.f32 %v344
      %vm352 = vweird.f32 %v346
      %vm353 = vmor %vm351, %vm352
      %v354 = vsel %vm353, %v346, %v350
      %v355 = vand.u32 2147483647, %v344
      %vm356 = vcmp.eq.f32.partialorder %v355, 8.507059e+37
      %v357 = vand.u32 %v344, 2147483648
      %v358 = vor.u32 1.1754944e-38, %v357
      %v359 = vsel %vm356, %v358, %v354
      %v360 = vmul.f32 %v339, %v359
      %361 = vst.msk [vmem:[#allocation9] sm:$0xff] %vm61, %v360
    $region25: #{tpu_custom_call.1} parent=1 // pred_fallthru
      _
    // Predicated region
    $region26: #{tpu_custom_call.1} parent=1 // pred_check
      _
    $region27: #{tpu_custom_call.1} parent=1 // pred_check_branch
      %363 = sbr.rel (0) target = $region29
    $region28: #{tpu_custom_call.1} parent=1 // pred_region
      %365 = vsyncadd [#allocation8], 96
      %s366 = sshll.u32 [#allocation9], 4
      %s367 = int_to_ptr.vmem [resolvable:$true] %s366
      %s368 = sshll.u32 %s3, 4
      %s369 = int_to_ptr.hbm [resolvable:$true] %s368
      %374 = dma.vmem_to_hbm [thread:$0]  %s367, 32, %s369, [#allocation8], 32, 32, 2
    $region29: #{tpu_custom_call.1} parent=1 // pred_fallthru
      _
    // Predicated region
    $region30: #{tpu_custom_call.1} parent=1 // pred_check
      _
    $region31: #{tpu_custom_call.1} parent=1 // pred_check_branch
      %376 = sbr.rel (0) target = $region33
    $region32: #{tpu_custom_call.1} parent=1 // pred_region
      %378 = dma.done [#allocation8], 128
    $region33: #{tpu_custom_call.1} parent=1 // pred_fallthru
      _
    %379 = vsyncpa [#allocation7], 1
    %380 = vsyncpa [#allocation8], 1

</llo_original>
